<compile_context>
chip_gen: v6e
topology: v6e:2x2x1
jax: 0.10.0
libtpu: 0.0.40
codegen_flags: <defaults>
</compile_context>

<pallas_src>
import functools

import jax
import jax.numpy as jnp
from jax.experimental import pallas as pl
from jax.experimental.pallas import tpu as pltpu


# ----------------------------------------------------------------------------
# Helpers: tile picking and per-generation VMEM budget.
# ----------------------------------------------------------------------------
def _pick_tile(dim, target, align):
    """Largest multiple of `align` that divides `dim` and is <= target, else full dim."""
    t = (min(dim, target) // align) * align
    while t >= align:
        if dim % t == 0:
            return t
        t -= align
    return dim  # full dim always divides itself (and counts as "full extent")


def _vmem_limit_bytes():
    """Scoped-VMEM budget: ~70% of physical per-core VMEM, capped at 100 MiB.

    v5e/v6e have 128 MiB physical VMEM -> ~90 MiB; v7x has 64 MiB per TensorCore
    -> ~44 MiB.  If the query fails we fall back to the v7x-safe value.
    """
    try:
        phys = pltpu.get_tpu_info().vmem_capacity_bytes
    except Exception:
        phys = 64 * 1024 * 1024
    return int(min(phys * 0.7, 100 * 1024 * 1024))


# ----------------------------------------------------------------------------
# Kernel 1/2: tiled matmul (optionally + bias), f32 VMEM accumulator.
#   Activations arrive in their HBM dtype and are cast to bf16 on the VPU
#   inside the kernel (free slot); weights are pre-cast bf16 outside.
# ----------------------------------------------------------------------------
def _matmul_kernel(x_ref, w_ref, o_ref, acc_ref):
    @pl.when(pl.program_id(2) == 0)
    def _():
        acc_ref[...] = jnp.zeros_like(acc_ref)

    acc_ref[...] += jnp.dot(x_ref[...].astype(jnp.bfloat16), w_ref[...],
                            preferred_element_type=jnp.float32)

    @pl.when(pl.program_id(2) == pl.num_programs(2) - 1)
    def _():
        o_ref[...] = acc_ref[...].astype(o_ref.dtype)


def _matmul_bias_kernel(x_ref, w_ref, b_ref, o_ref, acc_ref):
    @pl.when(pl.program_id(2) == 0)
    def _():
        acc_ref[...] = jnp.zeros_like(acc_ref)

    acc_ref[...] += jnp.dot(x_ref[...].astype(jnp.bfloat16), w_ref[...],
                            preferred_element_type=jnp.float32)

    @pl.when(pl.program_id(2) == pl.num_programs(2) - 1)
    def _():
        o_ref[...] = (acc_ref[...] + b_ref[...]).astype(o_ref.dtype)


def matmul(x, w, bias=None, *, out_dtype=jnp.float32,
           tm_target=512, tn_target=512, tk_target=512):
    """x: (M, K), w: (K, N). bf16 MXU inputs (cast in-kernel for x), f32 accumulation."""
    M, K = x.shape
    _, N = w.shape
    tm = _pick_tile(M, tm_target, 8)      # sublane-aligned
    tn = _pick_tile(N, tn_target, 128)    # lane-aligned
    tk = _pick_tile(K, tk_target, 128)    # lane-aligned (or full-K fallback)
    grid = (M // tm, N // tn, K // tk)

    vmem_limit = _vmem_limit_bytes()
    # Guard against a pathological full-dim fallback silently blowing up VMEM.
    est = (2 * (tm * tk * x.dtype.itemsize            # x tile (double-buffered)
                + tk * tn * 2                          # w tile (bf16)
                + tm * tn * jnp.dtype(out_dtype).itemsize)  # out tile
           + tm * tn * 4)                              # accumulator
    if est > vmem_limit:
        raise ValueError(
            f"matmul tile selection ({tm},{tn},{tk}) needs ~{est} B of VMEM "
            f"(> budget {vmem_limit} B); pad dims to multiples of 8/128 or "
            f"lower the tile targets.")

    w_bf = w.astype(jnp.bfloat16)   # weights: pre-cast once outside the kernel

    in_specs = [pl.BlockSpec((tm, tk), lambda i, j, k: (i, k)),
                pl.BlockSpec((tk, tn), lambda i, j, k: (k, j))]
    args = [x, w_bf]
    if bias is not None:
        in_specs.append(pl.BlockSpec((1, tn), lambda i, j, k: (0, j)))
        args.append(bias.reshape(1, N).astype(jnp.float32))
        kernel = _matmul_bias_kernel
    else:
        kernel = _matmul_kernel

    return pl.pallas_call(
        kernel,
        out_shape=jax.ShapeDtypeStruct((M, N), out_dtype),
        grid=grid,
        in_specs=in_specs,
        out_specs=pl.BlockSpec((tm, tn), lambda i, j, k: (i, j)),
        scratch_shapes=[pltpu.VMEM((tm, tn), jnp.float32)],
        compiler_params=pltpu.CompilerParams(
            dimension_semantics=("parallel", "parallel", "arbitrary"),
            vmem_limit_bytes=vmem_limit),
    )(*args)


# ----------------------------------------------------------------------------
# Kernel 3: attention, one (batch, query-tile) pair per grid step.
#   q tile (tq, inner), k/v slabs (N, inner) are lane-dense column blocks of
#   the fused qkv tensor.  Heads are split on the loaded values and processed
#   by a single batched einsum per matmul.  Softmax in f32 with an exact
#   normalization (returned attn rows sum to 1).
# ----------------------------------------------------------------------------
def _attention_kernel(q_ref, k_ref, v_ref, o_ref, attn_ref, *, num_heads, d_k, scale):
    tq = q_ref.shape[0]
    n_kv = k_ref.shape[0]
    inner = num_heads * d_k

    # lane-dense slab loads; split heads on values (no strided / masked ref access)
    q = q_ref[...].reshape(tq, num_heads, d_k)       # (tq, H, D) bf16
    k = k_ref[...].reshape(n_kv, num_heads, d_k)     # (N,  H, D) bf16
    v = v_ref[...].reshape(n_kv, num_heads, d_k)     # (N,  H, D) bf16

    # fold scale into q: tq*inner mults on the VPU instead of H*tq*N
    qs = (q.astype(jnp.float32) * scale).astype(jnp.bfloat16)

    # scores for all heads in one batched MXU call: (H, tq, N), f32 accumulation
    dots = jnp.einsum("qhd,khd->hqk", qs, k, preferred_element_type=jnp.float32)

    # numerically stable softmax in f32; exact divide so returned rows sum to 1
    m = jnp.max(dots, axis=-1, keepdims=True)
    e = jnp.exp(dots - m)
    p = e / jnp.sum(e, axis=-1, keepdims=True)        # (H, tq, N) f32
    attn_ref[...] = p.astype(attn_ref.dtype)

    # out = attn @ v per head, merged back to a lane-dense (tq, inner) slab
    out = jnp.einsum("hqk,khd->qhd", p.astype(jnp.bfloat16), v,
                     preferred_element_type=jnp.float32)   # (tq, H, D)
    o_ref[...] = out.reshape(tq, inner).astype(o_ref.dtype)


def _pick_attn_tq(N, num_heads, inner, attn_itemsize, budget):
    tq = _pick_tile(N, 512, 8)
    while True:
        need = (2 * (tq * inner * 2                          # q tile (bf16)
                     + tq * inner * 2                        # out tile (bf16)
                     + num_heads * tq * N * attn_itemsize)   # attn tile
                + 2 * 2 * N * inner * 2)                     # k + v slabs
        if need <= budget or tq <= 8:
            return tq
        nxt = _pick_tile(N, tq // 2, 8)
        if nxt >= tq:
            return tq
        tq = nxt


def attention(qkv, *, num_heads, d_k, scale,
              attn_dtype=jnp.float32, out_dtype=jnp.bfloat16):
    """qkv: (B, N, 3*inner) bf16 -> (out (B, N, inner), attn (B, H, N, N))."""
    B, N, three_inner = qkv.shape
    inner = num_heads * d_k
    assert three_inner == 3 * inner
    # NOTE: inner should be a multiple of 128 so the q/k/v column blocks are
    # lane-aligned (true for the module defaults: 8 heads * d_k 64 = 512).

    vmem_limit = _vmem_limit_bytes()
    tq = _pick_attn_tq(N, num_heads, inner, jnp.dtype(attn_dtype).itemsize,
                       budget=int(vmem_limit * 0.6))
    grid = (B, N // tq)

    kernel = functools.partial(_attention_kernel,
                               num_heads=num_heads, d_k=d_k, scale=scale)
    return pl.pallas_call(
        kernel,
        out_shape=(jax.ShapeDtypeStruct((B, N, inner), out_dtype),
                   jax.ShapeDtypeStruct((B, num_heads, N, N), attn_dtype)),
        grid=grid,
        in_specs=[
            # q tile: columns [0, inner)
            pl.BlockSpec((None, tq, inner), lambda b, qi: (b, qi, 0)),
            # k slab: columns [inner, 2*inner)   (block index 1 on the last dim)
            pl.BlockSpec((None, N, inner), lambda b, qi: (b, 0, 1)),
            # v slab: columns [2*inner, 3*inner) (block index 2 on the last dim)
            pl.BlockSpec((None, N, inner), lambda b, qi: (b, 0, 2)),
        ],
        out_specs=(
            pl.BlockSpec((None, tq, inner), lambda b, qi: (b, qi, 0)),
            pl.BlockSpec((None, num_heads, tq, N), lambda b, qi: (b, 0, qi, 0)),
        ),
        compiler_params=pltpu.CompilerParams(
            dimension_semantics=("parallel", "parallel"),
            vmem_limit_bytes=vmem_limit),
    )(qkv, qkv, qkv)


# ----------------------------------------------------------------------------
# Module wrapper (forward pass of MultiHeadVanillaAttention, eval / no dropout)
# ----------------------------------------------------------------------------
def multi_head_vanilla_attention(x, params, *, num_heads, d_k,
                                 attn_dtype=jnp.float32):
    """x: (B, N, num_hidden) float32. Returns (out, attn) like the torch module."""
    B, N, num_hidden = x.shape
    inner_dim = num_heads * d_k
    scale = d_k ** (-0.5)
    project_out = not (num_heads == 1 and d_k == num_hidden)

    # --- QKV projection (tiled Pallas matmul, bf16 MXU / f32 acc, bf16 out) ---
    x2d = x.reshape(B * N, num_hidden)
    qkv = matmul(x2d, params["w_qkv"], out_dtype=jnp.bfloat16)       # (B*N, 3*inner)
    qkv = qkv.reshape(B, N, 3 * inner_dim)                           # view, no copy

    # --- attention (head split/merge inside the kernel, query-tiled grid) ---
    out_heads, attn = attention(qkv, num_heads=num_heads, d_k=d_k, scale=scale,
                                attn_dtype=attn_dtype)

    # --- output projection (tiled Pallas matmul + bias) or identity ---
    if project_out:
        out2d = matmul(out_heads.reshape(B * N, inner_dim),
                       params["w_out"], bias=params["b_out"],
                       out_dtype=jnp.float32)                        # (B*N, num_hidden)
        out = out2d.reshape(B, N, num_hidden)
    else:
        out = out_heads.astype(jnp.float32)
    return out, attn


# ----------------------------------------------------------------------------
# Pure-JAX f32 reference (for verification)
# ----------------------------------------------------------------------------
def reference(x, params, *, num_heads, d_k):
    B, N, num_hidden = x.shape
    inner_dim = num_heads * d_k
    scale = d_k ** (-0.5)
    qkv = x @ params["w_qkv"]
    q, k, v = jnp.split(qkv, 3, axis=-1)

    def sh(t):
        return t.reshape(B, N, num_heads, d_k).transpose(0, 2, 1, 3)

    q, k, v = map(sh, (q, k, v))
    dots = jnp.einsum("bhnd,bhmd->bhnm", q, k) * scale
    attn = jax.nn.softmax(dots, axis=-1)
    out = jnp.einsum("bhnm,bhmd->bhnd", attn, v)
    out = out.transpose(0, 2, 1, 3).reshape(B, N, inner_dim)
    out = out @ params["w_out"] + params["b_out"]
    return out, attn


if __name__ == "__main__":
    # Small shapes, module-default head config (8 heads x d_k=64 -> inner=512,
    # which keeps every per-head q/k/v column block lane-aligned).
    B, N = 2, 8
    num_hidden = 32
    num_heads = 8
    d_k = 64
    inner_dim = num_heads * d_k

    key = jax.random.PRNGKey(0)
    k1, k2, k3, k4 = jax.random.split(key, 4)

    x = jax.random.normal(k1, (B, N, num_hidden), dtype=jnp.float32)

    # Parameters kept in x @ W layout (i.e. torch weight transposed).
    params = {
        "w_qkv": jax.random.normal(k2, (num_hidden, 3 * inner_dim),
                                   dtype=jnp.float32) * 0.05,
        "w_out": jax.random.normal(k3, (inner_dim, num_hidden),
                                   dtype=jnp.float32) * 0.05,
        "b_out": jax.random.normal(k4, (num_hidden,), dtype=jnp.float32) * 0.01,
    }

    out, attn = multi_head_vanilla_attention(x, params,
                                             num_heads=num_heads, d_k=d_k)
    out = jax.block_until_ready(out)
    attn = jax.block_until_ready(attn)

    out_ref, attn_ref = reference(x, params, num_heads=num_heads, d_k=d_k)
    assert out.shape == (B, N, num_hidden)
    assert attn.shape == (B, num_heads, N, N)
    # Tolerances account for bf16 MXU inputs (softmax itself is exact f32).
    assert jnp.allclose(out, out_ref, atol=2e-2, rtol=2e-2), \
        float(jnp.max(jnp.abs(out - out_ref)))
    assert jnp.allclose(attn, attn_ref, atol=1e-2, rtol=1e-2), \
        float(jnp.max(jnp.abs(attn - attn_ref)))

    print("KERNEL_OK")
</pallas_src>

<mosaic_0001>
module attributes {stable_mosaic.version = 11 : i64} {
  func.func @_matmul_kernel(%arg0: i32, %arg1: i32, %arg2: i32, %arg3: memref<16x32xf32, #tpu.memory_space<vmem>>, %arg4: memref<32x512xbf16, #tpu.memory_space<vmem>>, %arg5: memref<16x512xbf16, #tpu.memory_space<vmem>>, %arg6: memref<16x512xf32, #tpu.memory_space<vmem>>) attributes {dimension_semantics = [#tpu.dimension_semantics<parallel>, #tpu.dimension_semantics<parallel>, #tpu.dimension_semantics<arbitrary>], iteration_bounds = array<i64: 1, 3, 1>, scalar_prefetch = 0 : i64, scratch_operands = 1 : i64, tpu.core_type = #tpu.core_type<tc>, window_params = [{transform_indices = @transform_0, window_bounds = array<i64: 16, 32>}, {transform_indices = @transform_1, window_bounds = array<i64: 32, 512>}, {transform_indices = @transform_2, window_bounds = array<i64: 16, 512>}]} {
    %c0_i32 = arith.constant 0 : i32
    %0 = arith.cmpi eq, %arg2, %c0_i32 : i32
    %1 = arith.extui %0 : i1 to i32
    %c0_i32_0 = arith.constant 0 : i32
    %2 = arith.cmpi ne, %1, %c0_i32_0 : i32
    scf.if %2 {
      %cst_10 = arith.constant 0.000000e+00 : f32
      %13 = vector.broadcast %cst_10 : f32 to vector<16x512xf32>
      %c0_11 = arith.constant 0 : index
      %c0_12 = arith.constant 0 : index
      %14 = vector.load %arg6[%c0_11, %c0_12] : memref<16x512xf32, #tpu.memory_space<vmem>>, vector<16x512xf32>
      tpu.vector_store %arg6[%c0_11, %c0_12], %13 {strides = array<i32>} : memref<16x512xf32, #tpu.memory_space<vmem>>, vector<16x512xf32>,
    } else {
    }
    %c0 = arith.constant 0 : index
    %c0_1 = arith.constant 0 : index
    %3 = vector.load %arg6[%c0, %c0_1] : memref<16x512xf32, #tpu.memory_space<vmem>>, vector<16x512xf32>
    %c0_2 = arith.constant 0 : index
    %c0_3 = arith.constant 0 : index
    %4 = vector.load %arg3[%c0_2, %c0_3] : memref<16x32xf32, #tpu.memory_space<vmem>>, vector<16x32xf32>
    %5 = arith.truncf %4 : vector<16x32xf32> to vector<16x32xbf16>
    %c0_4 = arith.constant 0 : index
    %c0_5 = arith.constant 0 : index
    %6 = vector.load %arg4[%c0_4, %c0_5] : memref<32x512xbf16, #tpu.memory_space<vmem>>, vector<32x512xbf16>
    %cst = arith.constant dense<0.000000e+00> : vector<16x512xf32>
    %7 = tpu.matmul %5, %6, %cst {dimension_numbers = #tpu.dot_dimension_numbers<[1], [0], [0], [1], [0, 0, 1, 1], [], []>} : vector<16x32xbf16>, vector<32x512xbf16>, vector<16x512xf32> -> vector<16x512xf32>
    %8 = arith.addf %3, %7 : vector<16x512xf32>
    %c0_6 = arith.constant 0 : index
    %c0_7 = arith.constant 0 : index
    %9 = vector.load %arg6[%c0_6, %c0_7] : memref<16x512xf32, #tpu.memory_space<vmem>>, vector<16x512xf32>
    tpu.vector_store %arg6[%c0_6, %c0_7], %8 {strides = array<i32>} : memref<16x512xf32, #tpu.memory_space<vmem>>, vector<16x512xf32>,
    %c0_i32_8 = arith.constant 0 : i32
    %10 = arith.cmpi eq, %arg2, %c0_i32_8 : i32
    %11 = arith.extui %10 : i1 to i32
    %c0_i32_9 = arith.constant 0 : i32
    %12 = arith.cmpi ne, %11, %c0_i32_9 : i32
    scf.if %12 {
      %c0_10 = arith.constant 0 : index
      %c0_11 = arith.constant 0 : index
      %13 = vector.load %arg6[%c0_10, %c0_11] : memref<16x512xf32, #tpu.memory_space<vmem>>, vector<16x512xf32>
      %14 = arith.truncf %13 : vector<16x512xf32> to vector<16x512xbf16>
      %c0_12 = arith.constant 0 : index
      %c0_13 = arith.constant 0 : index
      %15 = vector.load %arg5[%c0_12, %c0_13] : memref<16x512xbf16, #tpu.memory_space<vmem>>, vector<16x512xbf16>
      tpu.vector_store %arg5[%c0_12, %c0_13], %14 {strides = array<i32>} : memref<16x512xbf16, #tpu.memory_space<vmem>>, vector<16x512xbf16>,
    } else {
    }
    return
  }
  func.func @transform_0(%arg0: i32, %arg1: i32, %arg2: i32) -> (i32, i32) {
    %c0_i32 = arith.constant 0 : i32
    return %arg0, %arg2 : i32, i32
  }
  func.func @transform_1(%arg0: i32, %arg1: i32, %arg2: i32) -> (i32, i32) {
    %c0_i32 = arith.constant 0 : i32
    return %arg2, %arg1 : i32, i32
  }
  func.func @transform_2(%arg0: i32, %arg1: i32, %arg2: i32) -> (i32, i32) {
    %c0_i32 = arith.constant 0 : i32
    return %arg0, %arg1 : i32, i32
  }
}

</mosaic_0001>

<llo_original>
// kernel: tpu_custom_call.1
$region0: #{tpu_custom_call.1}
  #allocation0 [shape = 'u32[]', space=smem, size = 0x4, offset = 0x4, fixed_abs, tag = 'smem constant byte address 0x4 - core index']
  #allocation1 [shape = 'u32[144,128]{1,0:T(1,128)}', space=vmem, size = 0x12000, scoped, tag = 'internal scratch']
  #allocation2 [shape = 'f32[16,512]{1,0:T(8,128)}', space=vmem, size = 0x8000, scoped, tag = 'scratch operand']
  %s0 = inlined_call_operand.hbm [shape: f32[16,32], index: 0, kind: input, shape index: {}]
  %s1 = inlined_call_operand.hbm [shape: bf16[32,1536], index: 1, kind: input, shape index: {}]
  %s2 = inlined_call_operand.hbm [shape: bf16[16,1536], index: 2, kind: output, shape index: {}]
  %s3 = sld [smem:[#allocation0]]
  $region57: #{tpu_custom_call.1} parent=0
    _
  %s5 = ssub.s32 1, %s3
  %s6 = scalar_select 0, %s5, %s3
  $region1: #{tpu_custom_call.1} parent=0
    #allocation3 [shape = 'u8[8192]{0}', space=vmem, size = 0x2000, scoped, tag = 'input window, operand 0, single buffered']
    #allocation4 [shape = 's32[2]{0}', space=sflag, size = 0x8, scoped, tag = 'scoped memory for tpu_custom_call.1']
    #allocation5 [shape = 's32[2]{0}', space=sflag, size = 0x8, scoped, tag = 'scoped memory for tpu_custom_call.1']
    #allocation6 [shape = 'u8[65536]{0}', space=vmem, size = 0x10000, scoped, tag = 'input window, operand 1']
    #allocation7 [shape = 's32[2]{0}', space=sflag, size = 0x8, scoped, tag = 'scoped memory for tpu_custom_call.1']
    #allocation8 [shape = 'u8[32768]{0}', space=vmem, size = 0x8000, scoped, tag = 'output window, operand 0']
    %7 = vsyncpa [#allocation4], 0
    %8 = vsyncpa [#allocation7], 0
    %s9 = scalar_lea.sflag [#allocation7], 1
    %10 = vsyncpa %s9, 0
    %11 = vsyncpa [#allocation5], 0
    %s12 = scalar_lea.sflag [#allocation5], 1
    %13 = vsyncpa %s12, 0
    loop: start=0, step=1, limit=5
    $region2: #{tpu_custom_call.1} parent=1 // loop_pre_header
      _
    $region3: #{tpu_custom_call.1} parent=1 // loop_header
      %s15 = sphi 0, %s19
      %p16 = scmp.ge.s32.totalorder %s15, 5
      %s22 = sphi 0, %s41
      %s23 = sphi 0, %s37
      %s24 = sphi 0, %s33
      %s25 = sphi 0, %s22
      %s26 = sphi 0, %s23
      %s27 = sphi 0, %s24
      %s28 = sphi 0, %s25
      %s29 = sphi 0, %s26
      %s30 = sphi 0, %s27
      %s46 = sphi 0, %s48
      %s49 = sphi 0, %s46
      %s50 = sphi 0, %s49
      %s66 = sphi 0, %s50
      %s74 = sphi 0, %s76
      %s77 = sphi 0, %s74
      %s78 = sphi 0, %s77
      %s94 = sphi 0, %s78
      %s102 = sphi 0, %s104
      %s105 = sphi 0, %s102
      %s106 = sphi 0, %s105
      %s122 = sphi 0, %s106
    $region4: #{tpu_custom_call.1} parent=1 // loop_header_branch
      %18 = sbr.rel (%p16) target = $region8
    $region5: #{tpu_custom_call.1} parent=1 // loop_body
      %s20 = ssub.s32 %s15, 1
      %s21 = ssub.s32 %s15, 2
      %s31 = sadd.s32 1, %s24
      %p32 = scmp.ge.s32.totalorder %s31, 1
      %s33 = scalar_select %p32, 0, %s31
      %s34 = sadd.s32 1, %s23
      %s35 = scalar_select %p32, %s34, %s23
      %p36 = scmp.ge.s32.totalorder %s35, 3
      %s37 = scalar_select %p36, 0, %s35
      %s38 = sadd.s32 1, %s22
      %s39 = scalar_select %p36, %s38, %s22
      %p40 = scmp.ge.s32.totalorder %s39, 1
      %s41 = scalar_select %p40, 0, %s39
      %s42 = ssub.s32 %s22, %s41
      %s43 = ssub.s32 %s24, %s33
      %s44 = sor.u32 %s42, %s43
      %p45 = scmp.eq.s32.totalorder %s44, 0
      %s47 = sadd.s32 %s46, 1
      %s48 = scalar_select %p45, %s46, %s47
      %p51 = pneg %p45
      %p52 = scmp.eq.s32.totalorder %s15, 2
      %p53 = por %p51, %p52
      %p54 = scmp.ne.s32.totalorder %s46, %s49
      %p55 = scmp.eq.s32.totalorder %s15, 0
      %p56 = por %p54, %p55
      %p57 = scmp.ne.s32.totalorder %s46, %s49
      %p58 = scmp.eq.s32.totalorder %s20, 2
      %p59 = por %p57, %p58
      %p60 = scmp.ne.s32.totalorder %s49, %s50
      %p61 = scmp.eq.s32.totalorder %s20, 0
      %p62 = por %p60, %p61
      %p63 = scmp.ne.s32.totalorder %s49, %s50
      %p64 = scmp.eq.s32.totalorder %s21, 2
      %p65 = por %p63, %p64
      %p67 = scmp.ne.s32.totalorder %s50, %s66
      %p68 = scmp.eq.s32.totalorder %s21, 0
      %p69 = por %p67, %p68
      %s70 = ssub.s32 %s24, %s33
      %s71 = ssub.s32 %s23, %s37
      %s72 = sor.u32 %s70, %s71
      %p73 = scmp.eq.s32.totalorder %s72, 0
      %s75 = sadd.s32 %s74, 1
      %s76 = scalar_select %p73, %s74, %s75
      %p79 = pneg %p73
      %p80 = scmp.eq.s32.totalorder %s15, 2
      %p81 = por %p79, %p80
      %p82 = scmp.ne.s32.totalorder %s74, %s77
      %p83 = scmp.eq.s32.totalorder %s15, 0
      %p84 = por %p82, %p83
      %p85 = scmp.ne.s32.totalorder %s74, %s77
      %p86 = scmp.eq.s32.totalorder %s20, 2
      %p87 = por %p85, %p86
      %p88 = scmp.ne.s32.totalorder %s77, %s78
      %p89 = scmp.eq.s32.totalorder %s20, 0
      %p90 = por %p88, %p89
      %p91 = scmp.ne.s32.totalorder %s77, %s78
      %p92 = scmp.eq.s32.totalorder %s21, 2
      %p93 = por %p91, %p92
      %p95 = scmp.ne.s32.totalorder %s78, %s94
      %p96 = scmp.eq.s32.totalorder %s21, 0
      %p97 = por %p95, %p96
      %s98 = ssub.s32 %s22, %s41
      %s99 = ssub.s32 %s23, %s37
      %s100 = sor.u32 %s98, %s99
      %p101 = scmp.eq.s32.totalorder %s100, 0
      %s103 = sadd.s32 %s102, 1
      %s104 = scalar_select %p101, %s102, %s103
      %p107 = pneg %p101
      %p108 = scmp.eq.s32.totalorder %s15, 2
      %p109 = por %p107, %p108
      %p110 = scmp.ne.s32.totalorder %s102, %s105
      %p111 = scmp.eq.s32.totalorder %s15, 0
      %p112 = por %p110, %p111
      %p113 = scmp.ne.s32.totalorder %s102, %s105
      %p114 = scmp.eq.s32.totalorder %s20, 2
      %p115 = por %p113, %p114
      %p116 = scmp.ne.s32.totalorder %s105, %s106
      %p117 = scmp.eq.s32.totalorder %s20, 0
      %p118 = por %p116, %p117
      %p119 = scmp.ne.s32.totalorder %s105, %s106
      %p120 = scmp.eq.s32.totalorder %s21, 2
      %p121 = por %p119, %p120
      %p123 = scmp.ne.s32.totalorder %s106, %s122
      %p124 = scmp.eq.s32.totalorder %s21, 0
      %p125 = por %p123, %p124
      %p126 = scmp.le.s32.totalorder 1, %s15
      %p127 = scmp.lt.s32.totalorder %s15, 4
      %p128 = pnand %p126, %p127
      %p129 = pneg %p128
      // Predicated region
      $region9: #{tpu_custom_call.1} parent=5 // pred_check
        _
      $region10: #{tpu_custom_call.1} parent=5 // pred_check_branch
        %131 = sbr.rel (%p128) target = $region12
      $region11: #{tpu_custom_call.1} parent=5 // pred_region
        %s132 = ssub.s32 %s15, 1
        // Predicated region
        $region13: #{tpu_custom_call.1} parent=11 // pred_check
          %p133 = pneg %p62
        $region14: #{tpu_custom_call.1} parent=11 // pred_check_branch
          %135 = sbr.rel (%p133) target = $region16
        $region15: #{tpu_custom_call.1} parent=11 // pred_region
          %s136 = smul.u32 2, %s25
          %s138 = ssub.s32 256, 256
          %139 = vsyncadd [#allocation4], %s138
          %s140 = sadd.s32 %s27, %s136
          %s141 = smul.addr %s140, 128
          %s142 = scalar_lea.hbm %s0, %s141
          %s143 = sshll.u32 [#allocation3], 4
          %s144 = int_to_ptr.vmem [resolvable:$true] %s143
          %149 = dma.hbm_to_vmem [thread:$0]  %s142, 256, %s144, [#allocation4], 128, 128, 8
        $region16: #{tpu_custom_call.1} parent=11 // pred_fallthru
          _
      $region12: #{tpu_custom_call.1} parent=5 // pred_fallthru
        _
      %p150 = scmp.lt.s32.totalorder %s15, 3
      // Predicated region
      $region17: #{tpu_custom_call.1} parent=5 // pred_check
        %p151 = pneg %p150
      $region18: #{tpu_custom_call.1} parent=5 // pred_check_branch
        %153 = sbr.rel (%p151) target = $region20
      $region19: #{tpu_custom_call.1} parent=5 // pred_region
        // Predicated region
        $region21: #{tpu_custom_call.1} parent=19 // pred_check
          %p154 = pneg %p84
        $region22: #{tpu_custom_call.1} parent=19 // pred_check_branch
          %156 = sbr.rel (%p154) target = $region24
        $region23: #{tpu_custom_call.1} parent=19 // pred_region
          %s157 = sand.u32 %s74, 1
          %s158 = scalar_lea.sflag [#allocation7], %s157
          %s159 = sand.u32 %s74, 1
          %s160 = smul.addr %s159, 64
          %s161 = scalar_lea.vmem [#allocation6], %s160
          %s162 = smul.u32 4, %s24
          %s163 = smul.u32 4, %s23
          %s165 = ssub.s32 1024, 1024
          %166 = vsyncadd %s158, %s165
          %s167 = smul.addr %s162, 12
          %s168 = sadd.s32 %s163, %s167
          %s169 = smul.addr %s168, 64
          %s170 = scalar_lea.hbm %s1, %s169
          %s171 = sshll.u32 %s161, 4
          %s172 = int_to_ptr.vmem [resolvable:$true] %s171
          %177 = dma.hbm_to_vmem [thread:$0]  %s170, 1024, %s172, %s158, 768, 256, 16
        $region24: #{tpu_custom_call.1} parent=19 // pred_fallthru
          _
      $region20: #{tpu_custom_call.1} parent=5 // pred_fallthru
        _
      %p178 = scmp.le.s32.totalorder 1, %s15
      %p179 = scmp.lt.s32.totalorder %s15, 4
      %p180 = pnand %p178, %p179
      %p181 = pneg %p180
      // Predicated region
      $region25: #{tpu_custom_call.1} parent=5 // pred_check
        _
      $region26: #{tpu_custom_call.1} parent=5 // pred_check_branch
        %183 = sbr.rel (%p180) target = $region28
      $region27: #{tpu_custom_call.1} parent=5 // pred_region
        %s184 = ssub.s32 %s15, 1
        // Predicated region
        $region29: #{tpu_custom_call.1} parent=27 // pred_check
          %p185 = pneg %p62
        $region30: #{tpu_custom_call.1} parent=27 // pred_check_branch
          %187 = sbr.rel (%p185) target = $region32
        $region31: #{tpu_custom_call.1} parent=27 // pred_region
          %188 = dma.done [#allocation4], 256
        $region32: #{tpu_custom_call.1} parent=27 // pred_fallthru
          _
        %s189 = sand.u32 %s77, 1
        %s190 = scalar_lea.sflag [#allocation7], %s189
        %s191 = sand.u32 %s77, 1
        %s192 = smul.addr %s191, 64
        %s193 = scalar_lea.vmem [#allocation6], %s192
        // Predicated region
        $region33: #{tpu_custom_call.1} parent=27 // pred_check
          %p194 = pneg %p90
        $region34: #{tpu_custom_call.1} parent=27 // pred_check_branch
          %196 = sbr.rel (%p194) target = $region36
        $region35: #{tpu_custom_call.1} parent=27 // pred_region
          %197 = dma.done %s190, 1024
        $region36: #{tpu_custom_call.1} parent=27 // pred_fallthru
          _
        %p198 = pneg %p62
        %p199 = pneg %p59
        %s200 = sand.u32 %s77, 1
        %s201 = scalar_lea.sflag [#allocation7], %s200
        %s202 = sand.u32 %s77, 1
        %s203 = smul.addr %s202, 64
        %s204 = scalar_lea.vmem [#allocation6], %s203
        %p205 = pneg %p90
        %p206 = pneg %p87
        %p207 = pneg %p118
        %p208 = pneg %p115
        %s209 = sand.u32 %s105, 1
        %s210 = scalar_lea.sflag [#allocation5], %s209
        %s211 = sand.u32 %s105, 1
        %s212 = smul.addr %s211, 32
        %s213 = scalar_lea.vmem [#allocation8], %s212
        %s214 = smul.u32 2, %s25
        %s215 = smul.u32 4, %s27
        %s216 = smul.u32 4, %s26
        %s217 = smul.u32 2, %s25
        %s218 = smul.u32 4, %s26
        %p220 = scmp.eq.s32.totalorder %s27, 0
        // Predicated region
        $region37: #{tpu_custom_call.1} parent=27 // pred_check
          %p221 = pneg %p220
        $region38: #{tpu_custom_call.1} parent=27 // pred_check_branch
          %223 = sbr.rel (%p221) target = $region40
        $region39: #{tpu_custom_call.1} parent=27 // pred_region
          %224 = vst [vmem:[#allocation2] sm:$0xff] 0.0
          %225 = vst [vmem:[#allocation2 + $0x8] sm:$0xff] 0.0
          %226 = vst [vmem:[#allocation2 + $0x10] sm:$0xff] 0.0
          %227 = vst [vmem:[#allocation2 + $0x18] sm:$0xff] 0.0
          %228 = vst [vmem:[#allocation2 + $0x20] sm:$0xff] 0.0
          %229 = vst [vmem:[#allocation2 + $0x28] sm:$0xff] 0.0
          %230 = vst [vmem:[#allocation2 + $0x30] sm:$0xff] 0.0
          %231 = vst [vmem:[#allocation2 + $0x38] sm:$0xff] 0.0
        $region40: #{tpu_custom_call.1} parent=27 // pred_fallthru
          _
        %v232 = vld [vmem:[#allocation2] sm:$0xff]
        %v233 = vld [vmem:[#allocation2 + $0x8] sm:$0xff]
        %v234 = vld [vmem:[#allocation2 + $0x10] sm:$0xff]
        %v235 = vld [vmem:[#allocation2 + $0x18] sm:$0xff]
        %v236 = vld [vmem:[#allocation2 + $0x20] sm:$0xff]
        %v237 = vld [vmem:[#allocation2 + $0x28] sm:$0xff]
        %v238 = vld [vmem:[#allocation2 + $0x30] sm:$0xff]
        %v239 = vld [vmem:[#allocation2 + $0x38] sm:$0xff]
        %v240 = vld [vmem:[#allocation3] sm:$0xff]
        %v241 = vld [vmem:[#allocation3 + $0x8] sm:$0xff]
        %v242 = vpack.c.bf16 %v241, %v240
        %v243 = vld [vmem:[%s193] sm:$0xff]
        %v244 = vld [vmem:[%s193 + $0x8] sm:$0xff]
        %v245 = vld [vmem:[%s193 + $0x10] sm:$0xff]
        %v246 = vld [vmem:[%s193 + $0x18] sm:$0xff]
        %v247 = vld [vmem:[%s193 + $0x20] sm:$0xff]
        %v248 = vld [vmem:[%s193 + $0x28] sm:$0xff]
        %v249 = vld [vmem:[%s193 + $0x30] sm:$0xff]
        %v250 = vld [vmem:[%s193 + $0x38] sm:$0xff]
        %v259 = vunpack.c.l.b16 %v243
        %v260 = vunpack.c.h.b16 %v243
        %v261 = vunpack.c.l.b16 %v244
        %v262 = vunpack.c.h.b16 %v244
        %v263 = vunpack.c.l.b16 %v245
        %v264 = vunpack.c.h.b16 %v245
        %v265 = vunpack.c.l.b16 %v246
        %v266 = vunpack.c.h.b16 %v246
        %v267 = vunpack.c.l.b16 %v247
        %v268 = vunpack.c.h.b16 %v247
        %v269 = vunpack.c.l.b16 %v248
        %v270 = vunpack.c.h.b16 %v248
        %v271 = vunpack.c.l.b16 %v249
        %v272 = vunpack.c.h.b16 %v249
        %v273 = vunpack.c.l.b16 %v250
        %v274 = vunpack.c.h.b16 %v250
        %v275 = vpack.c.b16 %v263, %v259
        %v276 = vpack.c.b16 %v264, %v260
        %v277 = vpack.c.b16 %v265, %v261
        %v278 = vpack.c.b16 %v266, %v262
        %v279 = vpack.c.b16 %v271, %v267
        %v280 = vpack.c.b16 %v272, %v268
        %v281 = vpack.c.b16 %v273, %v269
        %v282 = vpack.c.b16 %v274, %v270
        %vm291 = vcmask 261120
        %v293 = vsel %vm291, %v242, 0
        %295 = vmatprep.subr.bf16.mxu0 0
        %296 = vmatpush1.bf16.msra.mxu0 0
        %297 = vmatprep.subr.bf16.mxu0 0
        %298 = vmatpush1.bf16.msra.mxu0 0
        %299 = vmatprep.subr.bf16.mxu0 0
        %300 = vmatpush1.bf16.msra.mxu0 0
        %301 = vmatprep.subr.bf16.mxu0 0
        %302 = vmatpush1.bf16.msra.mxu0 0
        %303 = vmatprep.subr.bf16.mxu0 0
        %304 = vmatpush1.bf16.msra.mxu0 0
        %305 = vmatprep.subr.bf16.mxu0 0
        %306 = vmatpush1.bf16.msra.mxu0 0
        %307 = vmatprep.subr.bf16.mxu0 %v280
        %308 = vmatpush1.bf16.msra.mxu0 %v279
        %309 = vmatprep.subr.bf16.mxu0 %v276
        %310 = vmatpush1.bf16.msra.mxu0 %v275
        %311 = vmatprep.subr.bf16.mxu0 0
        %312 = vmatpush2.bf16.msra.mxu0 0
        %313 = vmatprep.subr.bf16.mxu0 0
        %314 = vmatpush2.bf16.msra.mxu0 0
        %315 = vmatprep.subr.bf16.mxu0 0
        %316 = vmatpush2.bf16.msra.mxu0 0
        %317 = vmatprep.subr.bf16.mxu0 0
        %318 = vmatpush2.bf16.msra.mxu0 0
        %319 = vmatprep.subr.bf16.mxu0 0
        %320 = vmatpush2.bf16.msra.mxu0 0
        %321 = vmatprep.subr.bf16.mxu0 0
        %322 = vmatpush2.bf16.msra.mxu0 0
        %323 = vmatprep.subr.bf16.mxu0 0
        %324 = vmatpush2.bf16.msra.mxu0 0
        %325 = vmatprep.subr.bf16.mxu0 0
        %326 = vmatpush2.bf16.msra.mxu0 0
        %327 = vmatprep.mubr.bf16.mxu0 0
        %328 = vmatmul.mubr.bf16.gmra.mxu0 %v293
        %v329 = vpop.f32.mrf.mxu0
        %v330 = vadd.f32 0.0, %v329
        %v331 = vpop.f32.mrf.mxu0
        %v332 = vadd.f32 0.0, %v331
        %v333 = vpop.f32.mrf.mxu0
        %v334 = vadd.f32 0.0, %v333
        %v335 = vpop.f32.mrf.mxu0
        %v336 = vadd.f32 0.0, %v335
        %337 = vdwg.mxu0
        %338 = vmatprep.subr.bf16.mxu0 0
        %339 = vmatpush1.bf16.msra.mxu0 0
        %340 = vmatprep.subr.bf16.mxu0 0
        %341 = vmatpush1.bf16.msra.mxu0 0
        %342 = vmatprep.subr.bf16.mxu0 0
        %343 = vmatpush1.bf16.msra.mxu0 0
        %344 = vmatprep.subr.bf16.mxu0 0
        %345 = vmatpush1.bf16.msra.mxu0 0
        %346 = vmatprep.subr.bf16.mxu0 0
        %347 = vmatpush1.bf16.msra.mxu0 0
        %348 = vmatprep.subr.bf16.mxu0 0
        %349 = vmatpush1.bf16.msra.mxu0 0
        %350 = vmatprep.subr.bf16.mxu0 %v282
        %351 = vmatpush1.bf16.msra.mxu0 %v281
        %352 = vmatprep.subr.bf16.mxu0 %v278
        %353 = vmatpush1.bf16.msra.mxu0 %v277
        %354 = vmatprep.subr.bf16.mxu0 0
        %355 = vmatpush2.bf16.msra.mxu0 0
        %356 = vmatprep.subr.bf16.mxu0 0
        %357 = vmatpush2.bf16.msra.mxu0 0
        %358 = vmatprep.subr.bf16.mxu0 0
        %359 = vmatpush2.bf16.msra.mxu0 0
        %360 = vmatprep.subr.bf16.mxu0 0
        %361 = vmatpush2.bf16.msra.mxu0 0
        %362 = vmatprep.subr.bf16.mxu0 0
        %363 = vmatpush2.bf16.msra.mxu0 0
        %364 = vmatprep.subr.bf16.mxu0 0
        %365 = vmatpush2.bf16.msra.mxu0 0
        %366 = vmatprep.subr.bf16.mxu0 0
        %367 = vmatpush2.bf16.msra.mxu0 0
        %368 = vmatprep.subr.bf16.mxu0 0
        %369 = vmatpush2.bf16.msra.mxu0 0
        %370 = vmatprep.mubr.bf16.mxu0 0
        %371 = vmatmul.mubr.bf16.gmra.mxu0 %v293
        %v372 = vpop.f32.mrf.mxu0
        %v373 = vadd.f32 0.0, %v372
        %v374 = vpop.f32.mrf.mxu0
        %v375 = vadd.f32 0.0, %v374
        %v376 = vpop.f32.mrf.mxu0
        %v377 = vadd.f32 0.0, %v376
        %v378 = vpop.f32.mrf.mxu0
        %v379 = vadd.f32 0.0, %v378
        %380 = vdwg.mxu0
        %v381 = vadd.f32 %v232, %v330
        %v382 = vadd.f32 %v233, %v332
        %v383 = vadd.f32 %v234, %v373
        %v384 = vadd.f32 %v235, %v375
        %v385 = vadd.f32 %v236, %v334
        %v386 = vadd.f32 %v237, %v336
        %v387 = vadd.f32 %v238, %v377
        %v388 = vadd.f32 %v239, %v379
        %389 = vst [vmem:[#allocation2] sm:$0xff] %v381
        %390 = vst [vmem:[#allocation2 + $0x8] sm:$0xff] %v382
        %391 = vst [vmem:[#allocation2 + $0x10] sm:$0xff] %v383
        %392 = vst [vmem:[#allocation2 + $0x18] sm:$0xff] %v384
        %393 = vst [vmem:[#allocation2 + $0x20] sm:$0xff] %v385
        %394 = vst [vmem:[#allocation2 + $0x28] sm:$0xff] %v386
        %395 = vst [vmem:[#allocation2 + $0x30] sm:$0xff] %v387
        %396 = vst [vmem:[#allocation2 + $0x38] sm:$0xff] %v388
        // Predicated region
        $region41: #{tpu_custom_call.1} parent=27 // pred_check
          %p397 = pneg %p220
        $region42: #{tpu_custom_call.1} parent=27 // pred_check_branch
          %399 = sbr.rel (%p397) target = $region44
        $region43: #{tpu_custom_call.1} parent=27 // pred_region
          %v400 = vld [vmem:[#allocation2] sm:$0xff]
          %v401 = vld [vmem:[#allocation2 + $0x8] sm:$0xff]
          %v402 = vld [vmem:[#allocation2 + $0x10] sm:$0xff]
          %v403 = vld [vmem:[#allocation2 + $0x18] sm:$0xff]
          %v404 = vld [vmem:[#allocation2 + $0x20] sm:$0xff]
          %v405 = vld [vmem:[#allocation2 + $0x28] sm:$0xff]
          %v406 = vld [vmem:[#allocation2 + $0x30] sm:$0xff]
          %v407 = vld [vmem:[#allocation2 + $0x38] sm:$0xff]
          %v408 = vpack.c.bf16 %v404, %v400
          %v409 = vpack.c.bf16 %v405, %v401
          %v410 = vpack.c.bf16 %v406, %v402
          %v411 = vpack.c.bf16 %v407, %v403
          %v416 = vunpack.c.l.b16 %v408
          %v417 = vunpack.c.l.b16 %v409
          %v418 = vunpack.c.l.b16 %v410
          %v419 = vunpack.c.l.b16 %v411
          %v420 = vunpack.c.h.b16 %v408
          %v421 = vunpack.c.h.b16 %v409
          %v422 = vunpack.c.h.b16 %v410
          %v423 = vunpack.c.h.b16 %v411
          %v424 = vpack.c.b16 %v417, %v416
          %v425 = vpack.c.b16 %v419, %v418
          %v426 = vpack.c.b16 %v421, %v420
          %v427 = vpack.c.b16 %v423, %v422
          %432 = vst [vmem:[%s213] sm:$0xff] %v424
          %433 = vst [vmem:[%s213 + $0x8] sm:$0xff] %v425
          %434 = vst [vmem:[%s213 + $0x10] sm:$0xff] %v426
          %435 = vst [vmem:[%s213 + $0x18] sm:$0xff] %v427
        $region44: #{tpu_custom_call.1} parent=27 // pred_fallthru
          _
        %s436 = sand.u32 %s105, 1
        %s437 = scalar_lea.sflag [#allocation5], %s436
        %s438 = sand.u32 %s105, 1
        %s439 = smul.addr %s438, 32
        %s440 = scalar_lea.vmem [#allocation8], %s439
        // Predicated region
        $region45: #{tpu_custom_call.1} parent=27 // pred_check
          %p441 = pneg %p115
        $region46: #{tpu_custom_call.1} parent=27 // pred_check_branch
          %443 = sbr.rel (%p441) target = $region48
        $region47: #{tpu_custom_call.1} parent=27 // pred_region
          %s444 = smul.u32 2, %s25
          %s445 = smul.u32 4, %s26
          %s447 = ssub.s32 512, 512
          %448 = vsyncadd %s437, %s447
          %s449 = smul.addr %s444, 12
          %s450 = sadd.s32 %s445, %s449
          %s451 = smul.addr %s450, 64
          %s452 = scalar_lea.hbm %s2, %s451
          %s453 = sshll.u32 %s440, 4
          %s454 = int_to_ptr.vmem [resolvable:$true] %s453
          %459 = dma.vmem_to_hbm [thread:$0]  %s454, 512, %s452, %s437, 256, 768, 16
        $region48: #{tpu_custom_call.1} parent=27 // pred_fallthru
          _
      $region28: #{tpu_custom_call.1} parent=5 // pred_fallthru
        _
      %p460 = scmp.le.s32.totalorder 2, %s15
      // Predicated region
      $region49: #{tpu_custom_call.1} parent=5 // pred_check
        %p461 = pneg %p460
      $region50: #{tpu_custom_call.1} parent=5 // pred_check_branch
        %463 = sbr.rel (%p461) target = $region52
      $region51: #{tpu_custom_call.1} parent=5 // pred_region
        %s464 = ssub.s32 %s15, 2
        // Predicated region
        $region53: #{tpu_custom_call.1} parent=51 // pred_check
          %p465 = pneg %p121
        $region54: #{tpu_custom_call.1} parent=51 // pred_check_branch
          %467 = sbr.rel (%p465) target = $region56
        $region55: #{tpu_custom_call.1} parent=51 // pred_region
          %s468 = sand.u32 %s106, 1
          %s469 = scalar_lea.sflag [#allocation5], %s468
          %s470 = sand.u32 %s106, 1
          %s471 = smul.addr %s470, 32
          %s472 = scalar_lea.vmem [#allocation8], %s471
          %473 = dma.done %s469, 512
        $region56: #{tpu_custom_call.1} parent=51 // pred_fallthru
          _
      $region52: #{tpu_custom_call.1} parent=5 // pred_fallthru
        _
    $region6: #{tpu_custom_call.1} parent=1 // loop_footer
      %s19 = sadd.s32 1, %s15
    $region7: #{tpu_custom_call.1} parent=1 // loop_footer_branch
      %14 = sbr.rel target = $region3
    $region8: #{tpu_custom_call.1} parent=1 // loop_exit
      _
    %474 = vsyncpa [#allocation4], 1
    %s475 = scalar_lea.sflag [#allocation4], 1
    %476 = vsyncpa %s475, 1
    %477 = vsyncpa [#allocation7], 1
    %s478 = scalar_lea.sflag [#allocation7], 1
    %479 = vsyncpa %s478, 1
    %480 = vsyncpa [#allocation5], 1
    %s481 = scalar_lea.sflag [#allocation5], 1
    %482 = vsyncpa %s481, 1

</llo_original>
